<compile_context>
chip_gen: v5e
topology: v5e:2x2
jax: 0.10.0
libtpu: 0.0.40
codegen_flags: <defaults>
</compile_context>

<pallas_src>
import functools

import jax
import jax.numpy as jnp
from jax.experimental import pallas as pl
from jax.experimental.pallas import tpu as pltpu

EPS = 1e-5      # PyTorch BatchNorm2d default
LANE = 128      # TPU lane width


def _round_up(x, m):
    return (x + m - 1) // m * m


@functools.lru_cache(maxsize=None)
def _vmem_limit_bytes():
    """Generation-aware VMEM budget: ~75% of physical, capped at 100 MiB."""
    try:
        phys = pltpu.get_tpu_info().vmem_capacity_bytes
    except Exception:
        phys = 64 * 1024 * 1024          # conservative (v7x per-core size)
    return int(min(phys * 3 // 4, 100 * 1024 * 1024))


@functools.lru_cache(maxsize=None)
def _channel_align():
    """256-align K/Cout on v6e/v7x (256x256 MXU); 128 on v5e / unknown."""
    try:
        kind = jax.devices()[0].device_kind.lower()
    except Exception:
        kind = ""
    return 128 if "v5" in kind else 256


def _align_channels(d):
    a = _channel_align()
    if a > LANE and d > LANE:
        return _round_up(d, a)
    return _round_up(d, LANE)


def _pick_tiles(mp, kp, cp, *, out_itemsize, residual):
    """Choose (tm, tk, tn). mp/kp/cp are already multiples of 128."""
    budget = _vmem_limit_bytes()

    tn = 256 if (cp % 256 == 0 and _channel_align() >= 256) else 128
    tn = min(tn, cp)

    tm = 512
    while tm > 128 and mp % tm != 0:
        tm -= 128

    # Guarantee >=2 blocks along a parallel axis when possible (v7x megacore),
    # while keeping tm a multiple of 128 / 256 for native layouts.
    if mp // tm == 1 and cp // tn == 1:
        if tm % 256 == 0:
            tm //= 2
        elif tn % 256 == 0:
            tn //= 2

    def fits(tk):
        need = (2 * tm * tk * 2            # x blocks (bf16, double buffered)
                + 2 * tk * tn * 2          # w blocks (bf16, double buffered)
                + 2 * tn * 4               # bias blocks
                + 2 * tm * tn * out_itemsize   # output blocks
                + tm * tn * 4)             # f32 accumulator scratch
        if residual:
            need += 2 * tm * tn * 4        # f32 residual blocks
        return need <= budget

    # Prefer a single full-K panel: no K loop, weight DMA skipped across M.
    tk = kp
    if not fits(tk):
        tk = LANE
        for cand in range(kp - LANE, LANE, -LANE):
            if kp % cand == 0 and fits(cand):
                tk = cand
                break
    return tm, tk, tn


def _cost_estimate(mp, kp, cp, tm, tk, tn, *, out_bytes_per, res_bytes_per=0):
    nj, ni, nk = cp // tn, mp // tm, kp // tk
    x_read = nj * mp * kp * 2                    # x re-read once per N tile
    # With a single K panel the weight block index is constant across M tiles,
    # so each (K, tn) strip is DMA'd once; otherwise it is re-read per M tile.
    w_read = (kp * cp if nk == 1 else ni * kp * cp) * 2
    b_read = cp * 4
    r_read = mp * cp * res_bytes_per
    out_wr = mp * cp * out_bytes_per
    return pl.CostEstimate(flops=2 * mp * kp * cp, transcendentals=0,
                           bytes_accessed=x_read + w_read + b_read
                           + r_read + out_wr)


# ------------------------------ Pallas kernels ------------------------------

def _mm_bias_kernel(x_ref, w_ref, b_ref, o_ref, acc_ref, *, relu):
    """o = (x @ w) + b, optional ReLU.  Grid axis 2 is the K reduction."""
    k = pl.program_id(2)

    @pl.when(k == 0)
    def _():
        acc_ref[...] = jnp.zeros_like(acc_ref)

    acc_ref[...] += jnp.dot(x_ref[...], w_ref[...],
                            preferred_element_type=jnp.float32)

    @pl.when(k == pl.num_programs(2) - 1)
    def _():
        y = acc_ref[...] + b_ref[...]
        if relu:
            y = jnp.maximum(y, 0.0)
        o_ref[...] = y.astype(o_ref.dtype)


def _mm_bias_res_kernel(x_ref, w_ref, b_ref, r_ref, o_ref, acc_ref, *, relu):
    """o = relu((x @ w) + b + residual) -- residual added in f32 epilogue."""
    k = pl.program_id(2)

    @pl.when(k == 0)
    def _():
        acc_ref[...] = jnp.zeros_like(acc_ref)

    acc_ref[...] += jnp.dot(x_ref[...], w_ref[...],
                            preferred_element_type=jnp.float32)

    @pl.when(k == pl.num_programs(2) - 1)
    def _():
        y = acc_ref[...] + b_ref[...] + r_ref[...]
        if relu:
            y = jnp.maximum(y, 0.0)
        o_ref[...] = y.astype(o_ref.dtype)


# ------------------------------ kernel wrappers ------------------------------

def fused_matmul_bn(x, w, b, *, relu, out_dtype):
    """x:(Mp,Kp) bf16, w:(Kp,Cp) bf16, b:(1,Cp) f32 -> (Mp,Cp) out_dtype."""
    mp, kp = x.shape
    cp = w.shape[1]
    out_b = jnp.dtype(out_dtype).itemsize
    tm, tk, tn = _pick_tiles(mp, kp, cp, out_itemsize=out_b, residual=False)
    grid = (cp // tn, mp // tm, kp // tk)     # (j, i, k): weight reuse over M

    cost = _cost_estimate(mp, kp, cp, tm, tk, tn, out_bytes_per=out_b)
    return pl.pallas_call(
        functools.partial(_mm_bias_kernel, relu=relu),
        out_shape=jax.ShapeDtypeStruct((mp, cp), out_dtype),
        grid_spec=pltpu.PrefetchScalarGridSpec(
            num_scalar_prefetch=0,
            grid=grid,
            in_specs=[
                pl.BlockSpec((tm, tk), lambda j, i, k: (i, k)),
                pl.BlockSpec((tk, tn), lambda j, i, k: (k, j)),
                pl.BlockSpec((1, tn), lambda j, i, k: (0, j)),
            ],
            out_specs=pl.BlockSpec((tm, tn), lambda j, i, k: (i, j)),
            scratch_shapes=[pltpu.VMEM((tm, tn), jnp.float32)]),
        compiler_params=pltpu.CompilerParams(
            dimension_semantics=("parallel", "parallel", "arbitrary"),
            vmem_limit_bytes=_vmem_limit_bytes()),
        cost_estimate=cost,
    )(x, w, b)


def fused_matmul_bn_residual(x, w, b, r, *, relu, out_dtype):
    """relu(x @ w + b + r), r is an f32 (Mp,Cp) residual added in the epilogue."""
    mp, kp = x.shape
    cp = w.shape[1]
    out_b = jnp.dtype(out_dtype).itemsize
    tm, tk, tn = _pick_tiles(mp, kp, cp, out_itemsize=out_b, residual=True)
    grid = (cp // tn, mp // tm, kp // tk)

    cost = _cost_estimate(mp, kp, cp, tm, tk, tn, out_bytes_per=out_b,
                          res_bytes_per=4)
    return pl.pallas_call(
        functools.partial(_mm_bias_res_kernel, relu=relu),
        out_shape=jax.ShapeDtypeStruct((mp, cp), out_dtype),
        grid_spec=pltpu.PrefetchScalarGridSpec(
            num_scalar_prefetch=0,
            grid=grid,
            in_specs=[
                pl.BlockSpec((tm, tk), lambda j, i, k: (i, k)),
                pl.BlockSpec((tk, tn), lambda j, i, k: (k, j)),
                pl.BlockSpec((1, tn), lambda j, i, k: (0, j)),
                pl.BlockSpec((tm, tn), lambda j, i, k: (i, j)),
            ],
            out_specs=pl.BlockSpec((tm, tn), lambda j, i, k: (i, j)),
            scratch_shapes=[pltpu.VMEM((tm, tn), jnp.float32)]),
        compiler_params=pltpu.CompilerParams(
            dimension_semantics=("parallel", "parallel", "arbitrary"),
            vmem_limit_bytes=_vmem_limit_bytes()),
        cost_estimate=cost,
    )(x, w, b, r)


# --------------------------------- JAX glue ----------------------------------

def im2col(x_nhwc, ksize, stride, pad):
    """Extract conv patches. Returns ((N*Ho*Wo, ksize*ksize*C), (N, Ho, Wo))."""
    n, h, w, c = x_nhwc.shape
    xp = jnp.pad(x_nhwc, ((0, 0), (pad, pad), (pad, pad), (0, 0)))
    ho = (h + 2 * pad - ksize) // stride + 1
    wo = (w + 2 * pad - ksize) // stride + 1
    cols = []
    for dy in range(ksize):
        for dx in range(ksize):
            cols.append(xp[:, dy:dy + stride * (ho - 1) + 1:stride,
                              dx:dx + stride * (wo - 1) + 1:stride, :])
    patches = jnp.stack(cols, axis=3)              # (N, Ho, Wo, kh*kw, C)
    return patches.reshape(n * ho * wo, ksize * ksize * c), (n, ho, wo)


def fold_bn(bn):
    """Inference BN -> per-channel (scale, bias)."""
    gamma, beta, mean, var = bn
    scale = gamma / jnp.sqrt(var + EPS)
    bias = beta - mean * scale
    return scale, bias


def fold_conv_weight(w_oihw, scale):
    """(Cout,Cin,kh,kw) -> (kh*kw*Cin, Cout) with BN scale folded in."""
    cout = w_oihw.shape[0]
    wt = jnp.transpose(w_oihw, (2, 3, 1, 0)).reshape(-1, cout)
    return wt * scale[None, :]


def _pad2d(a, rows, cols):
    return jnp.pad(a, ((0, rows - a.shape[0]), (0, cols - a.shape[1])))


def basic_block_forward(x_nchw, params, stride):
    # NCHW <-> NHWC only at the module boundary (keep NHWC when chaining).
    x = jnp.transpose(x_nchw, (0, 2, 3, 1)).astype(jnp.float32)
    n, h, w, cin = x.shape
    planes = params["w1"].shape[0]
    x_bf = x.astype(jnp.bfloat16)

    cp = _align_channels(planes)                   # lane/MXU-dense out channels

    # -------- conv1 (3x3, stride, pad=1) + bn1 + relu --------
    p1, (n, ho, wo) = im2col(x_bf, 3, stride, 1)
    m = n * ho * wo
    mp = _round_up(m, LANE)
    k1p = _align_channels(p1.shape[1])

    s1, b1 = fold_bn(params["bn1"])
    w1 = fold_conv_weight(params["w1"], s1)

    out1 = fused_matmul_bn(
        _pad2d(p1, mp, k1p),
        _pad2d(w1, k1p, cp).astype(jnp.bfloat16),
        _pad2d(b1[None, :], 1, cp),
        relu=True, out_dtype=jnp.bfloat16)
    out1_nhwc = out1[:m, :planes].reshape(n, ho, wo, planes)

    # -------- conv2 (3x3, 1, pad=1) + bn2 + shortcut + relu (one kernel) -----
    p2, _ = im2col(out1_nhwc, 3, 1, 1)
    s2, b2 = fold_bn(params["bn2"])
    w2 = fold_conv_weight(params["w2"], s2)

    if stride != 1 or cin != planes:
        # Projection shortcut (1x1 strided conv + BN): fold it into the main
        # matmul by concatenating its input along K and stacking its weight.
        xs = x_bf[:, ::stride, ::stride, :].reshape(m, cin)
        ss, bs = fold_bn(params["bns"])
        ws = fold_conv_weight(params["ws"], ss)               # (Cin, Cout)
        xcat = jnp.concatenate([p2, xs], axis=1)
        wcat = jnp.concatenate([w2, ws], axis=0)
        bias = b2 + bs
        kcp = _align_channels(xcat.shape[1])
        out = fused_matmul_bn(
            _pad2d(xcat, mp, kcp),
            _pad2d(wcat, kcp, cp).astype(jnp.bfloat16),
            _pad2d(bias[None, :], 1, cp),
            relu=True, out_dtype=jnp.bfloat16)
    else:
        # Identity shortcut: residual added in the kernel epilogue, in f32.
        k2p = _align_channels(p2.shape[1])
        res = x.reshape(m, planes)                            # f32 residual
        out = fused_matmul_bn_residual(
            _pad2d(p2, mp, k2p),
            _pad2d(w2, k2p, cp).astype(jnp.bfloat16),
            _pad2d(b2[None, :], 1, cp),
            _pad2d(res, mp, cp),
            relu=True, out_dtype=jnp.bfloat16)

    out_nhwc = out[:m, :planes].reshape(n, ho, wo, planes)
    return jnp.transpose(out_nhwc, (0, 3, 1, 2)).astype(jnp.float32)  # NCHW


# ----------------------------- reference (pure JAX) ---------------------------

def _conv_ref(x, w, stride, pad):
    return jax.lax.conv_general_dilated(
        x, w, (stride, stride), ((pad, pad), (pad, pad)),
        dimension_numbers=("NCHW", "OIHW", "NCHW"))


def _bn_ref(x, bn):
    gamma, beta, mean, var = bn
    inv = gamma / jnp.sqrt(var + EPS)
    return x * inv[None, :, None, None] + (beta - mean * inv)[None, :, None, None]


def basic_block_ref(x, params, stride):
    out = jax.nn.relu(_bn_ref(_conv_ref(x, params["w1"], stride, 1), params["bn1"]))
    out = _bn_ref(_conv_ref(out, params["w2"], 1, 1), params["bn2"])
    if stride != 1 or params["w1"].shape[1] != params["w1"].shape[0]:
        sc = _bn_ref(_conv_ref(x, params["ws"], stride, 0), params["bns"])
    else:
        sc = x
    return jax.nn.relu(out + sc)


# ------------------------------------ main ------------------------------------

if __name__ == "__main__":
    key = jax.random.PRNGKey(0)

    def bn_params(k, c):
        k1, k2, k3, k4 = jax.random.split(k, 4)
        gamma = 1.0 + 0.1 * jax.random.normal(k1, (c,), jnp.float32)
        beta = 0.1 * jax.random.normal(k2, (c,), jnp.float32)
        mean = 0.1 * jax.random.normal(k3, (c,), jnp.float32)
        var = 0.5 + 0.5 * jnp.abs(jax.random.normal(k4, (c,), jnp.float32))
        return (gamma, beta, mean, var)

    fwd = jax.jit(basic_block_forward, static_argnums=2)

    # Case 1: downsampling block (stride=2, projection shortcut).
    in_planes, planes, stride = 4, 8, 2
    n, h, w = 2, 16, 16
    ks = jax.random.split(key, 8)
    params = {
        "w1": 0.1 * jax.random.normal(ks[0], (planes, in_planes, 3, 3), jnp.float32),
        "bn1": bn_params(ks[1], planes),
        "w2": 0.1 * jax.random.normal(ks[2], (planes, planes, 3, 3), jnp.float32),
        "bn2": bn_params(ks[3], planes),
        "ws": 0.1 * jax.random.normal(ks[4], (planes, in_planes, 1, 1), jnp.float32),
        "bns": bn_params(ks[5], planes),
    }
    x = jax.random.normal(ks[6], (n, in_planes, h, w), jnp.float32)

    out = jax.block_until_ready(fwd(x, params, stride))
    ref = jax.block_until_ready(basic_block_ref(x, params, stride))
    assert out.shape == (n, planes, h // stride, w // stride), out.shape
    # bf16 MXU operands (f32 accumulate) -> compare at bf16-level tolerance.
    if not jnp.allclose(out, ref, atol=5e-2, rtol=5e-2):
        raise AssertionError("Pallas BasicBlock (projection shortcut) mismatch")

    # Case 2: identity-shortcut block (stride=1, in_planes == planes).
    planes2 = 8
    ks2 = jax.random.split(ks[7], 6)
    params2 = {
        "w1": 0.1 * jax.random.normal(ks2[0], (planes2, planes2, 3, 3), jnp.float32),
        "bn1": bn_params(ks2[1], planes2),
        "w2": 0.1 * jax.random.normal(ks2[2], (planes2, planes2, 3, 3), jnp.float32),
        "bn2": bn_params(ks2[3], planes2),
    }
    x2 = jax.random.normal(ks2[4], (n, planes2, h, w), jnp.float32)
    out2 = jax.block_until_ready(fwd(x2, params2, 1))
    ref2 = jax.block_until_ready(basic_block_ref(x2, params2, 1))
    assert out2.shape == (n, planes2, h, w), out2.shape
    if not jnp.allclose(out2, ref2, atol=5e-2, rtol=5e-2):
        raise AssertionError("Pallas BasicBlock (identity shortcut) mismatch")

    print("KERNEL_OK")
</pallas_src>

<mosaic_0001>
module attributes {stable_mosaic.version = 11 : i64} {
  func.func @_mm_bias_kernel(%arg0: i32, %arg1: i32, %arg2: i32, %arg3: memref<128x128xbf16, #tpu.memory_space<vmem>>, %arg4: memref<128x128xbf16, #tpu.memory_space<vmem>>, %arg5: memref<1x128xf32, #tpu.memory_space<vmem>>, %arg6: memref<128x128xbf16, #tpu.memory_space<vmem>>, %arg7: memref<128x128xf32, #tpu.memory_space<vmem>>) attributes {dimension_semantics = [#tpu.dimension_semantics<parallel>, #tpu.dimension_semantics<parallel>, #tpu.dimension_semantics<arbitrary>], iteration_bounds = array<i64: 1, 1, 1>, scalar_prefetch = 0 : i64, scratch_operands = 1 : i64, tpu.core_type = #tpu.core_type<tc>, window_params = [{transform_indices = @transform_0, window_bounds = array<i64: 128, 128>}, {transform_indices = @transform_1, window_bounds = array<i64: 128, 128>}, {transform_indices = @transform_2, window_bounds = array<i64: 1, 128>}, {transform_indices = @transform_3, window_bounds = array<i64: 128, 128>}]} {
    %c0_i32 = arith.constant 0 : i32
    %0 = arith.cmpi eq, %arg2, %c0_i32 : i32
    %1 = arith.extui %0 : i1 to i32
    %c0_i32_0 = arith.constant 0 : i32
    %2 = arith.cmpi ne, %1, %c0_i32_0 : i32
    scf.if %2 {
      %cst_10 = arith.constant 0.000000e+00 : f32
      %12 = vector.broadcast %cst_10 : f32 to vector<128x128xf32>
      %c0_11 = arith.constant 0 : index
      %c0_12 = arith.constant 0 : index
      %13 = vector.load %arg7[%c0_11, %c0_12] : memref<128x128xf32, #tpu.memory_space<vmem>>, vector<128x128xf32>
      tpu.vector_store %arg7[%c0_11, %c0_12], %12 {strides = array<i32>} : memref<128x128xf32, #tpu.memory_space<vmem>>, vector<128x128xf32>,
    } else {
    }
    %c0 = arith.constant 0 : index
    %c0_1 = arith.constant 0 : index
    %3 = vector.load %arg7[%c0, %c0_1] : memref<128x128xf32, #tpu.memory_space<vmem>>, vector<128x128xf32>
    %c0_2 = arith.constant 0 : index
    %c0_3 = arith.constant 0 : index
    %4 = vector.load %arg3[%c0_2, %c0_3] : memref<128x128xbf16, #tpu.memory_space<vmem>>, vector<128x128xbf16>
    %c0_4 = arith.constant 0 : index
    %c0_5 = arith.constant 0 : index
    %5 = vector.load %arg4[%c0_4, %c0_5] : memref<128x128xbf16, #tpu.memory_space<vmem>>, vector<128x128xbf16>
    %cst = arith.constant dense<0.000000e+00> : vector<128x128xf32>
    %6 = tpu.matmul %4, %5, %cst {dimension_numbers = #tpu.dot_dimension_numbers<[1], [0], [0], [1], [0, 0, 1, 1], [], []>} : vector<128x128xbf16>, vector<128x128xbf16>, vector<128x128xf32> -> vector<128x128xf32>
    %7 = arith.addf %3, %6 : vector<128x128xf32>
    %c0_6 = arith.constant 0 : index
    %c0_7 = arith.constant 0 : index
    %8 = vector.load %arg7[%c0_6, %c0_7] : memref<128x128xf32, #tpu.memory_space<vmem>>, vector<128x128xf32>
    tpu.vector_store %arg7[%c0_6, %c0_7], %7 {strides = array<i32>} : memref<128x128xf32, #tpu.memory_space<vmem>>, vector<128x128xf32>,
    %c0_i32_8 = arith.constant 0 : i32
    %9 = arith.cmpi eq, %arg2, %c0_i32_8 : i32
    %10 = arith.extui %9 : i1 to i32
    %c0_i32_9 = arith.constant 0 : i32
    %11 = arith.cmpi ne, %10, %c0_i32_9 : i32
    scf.if %11 {
      %c0_10 = arith.constant 0 : index
      %c0_11 = arith.constant 0 : index
      %12 = vector.load %arg7[%c0_10, %c0_11] : memref<128x128xf32, #tpu.memory_space<vmem>>, vector<128x128xf32>
      %c0_12 = arith.constant 0 : index
      %c0_13 = arith.constant 0 : index
      %13 = vector.load %arg5[%c0_12, %c0_13] : memref<1x128xf32, #tpu.memory_space<vmem>>, vector<1x128xf32>
      %14 = vector.broadcast %13 : vector<1x128xf32> to vector<128x128xf32>
      %15 = arith.addf %12, %14 : vector<128x128xf32>
      %cst_14 = arith.constant 0.000000e+00 : f32
      %16 = vector.broadcast %cst_14 : f32 to vector<128x128xf32>
      %17 = arith.maximumf %15, %16 : vector<128x128xf32>
      %18 = arith.truncf %17 : vector<128x128xf32> to vector<128x128xbf16>
      %c0_15 = arith.constant 0 : index
      %c0_16 = arith.constant 0 : index
      %19 = vector.load %arg6[%c0_15, %c0_16] : memref<128x128xbf16, #tpu.memory_space<vmem>>, vector<128x128xbf16>
      tpu.vector_store %arg6[%c0_15, %c0_16], %18 {strides = array<i32>} : memref<128x128xbf16, #tpu.memory_space<vmem>>, vector<128x128xbf16>,
    } else {
    }
    return
  }
  func.func @transform_0(%arg0: i32, %arg1: i32, %arg2: i32) -> (i32, i32) {
    %c0_i32 = arith.constant 0 : i32
    return %arg1, %arg2 : i32, i32
  }
  func.func @transform_1(%arg0: i32, %arg1: i32, %arg2: i32) -> (i32, i32) {
    %c0_i32 = arith.constant 0 : i32
    return %arg2, %arg0 : i32, i32
  }
  func.func @transform_2(%arg0: i32, %arg1: i32, %arg2: i32) -> (i32, i32) {
    %c0_i32 = arith.constant 0 : i32
    %c0_i32_0 = arith.constant 0 : i32
    return %c0_i32, %arg0 : i32, i32
  }
  func.func @transform_3(%arg0: i32, %arg1: i32, %arg2: i32) -> (i32, i32) {
    %c0_i32 = arith.constant 0 : i32
    return %arg1, %arg0 : i32, i32
  }
}

</mosaic_0001>

<llo_original>
// kernel: basic_block_forward.2
$region0: #{basic_block_forward.2}
  #allocation0 [shape = 'u32[]', space=smem, size = 0x4, offset = 0x4, fixed_abs, tag = 'smem constant byte address 0x4 - core index']
  #allocation1 [shape = 'u32[72,128]{1,0:T(1,128)}', space=vmem, size = 0x9000, scoped, tag = 'internal scratch']
  #allocation2 [shape = 'f32[128,128]{1,0:T(8,128)}', space=vmem, size = 0x10000, scoped, tag = 'scratch operand']
  %s0 = inlined_call_operand.vmem [shape: bf16[128,128], index: 0, kind: input, shape index: {}]
  %s1 = inlined_call_operand.vmem [shape: bf16[128,128], index: 1, kind: input, shape index: {}]
  %s2 = inlined_call_operand.vmem [shape: f32[1,128], index: 2, kind: input, shape index: {}]
  %s3 = inlined_call_operand.vmem [shape: bf16[128,128], index: 3, kind: output, shape index: {}]
  %s4 = sld [smem:[#allocation0]]
  $region30: #{basic_block_forward.2} parent=0
    _
  %s6 = ssub.s32 1, %s4
  %s7 = scalar_select 0, %s6, %s4
  // Predicated region
  $region2: #{basic_block_forward.2} parent=0 // pred_check
    _
  $region3: #{basic_block_forward.2} parent=0 // pred_check_branch
    %9 = sbr.rel (0) target = $region5
  $region4: #{basic_block_forward.2} parent=0 // pred_region
    _
  $region5: #{basic_block_forward.2} parent=0 // pred_fallthru
    _
  // Predicated region
  $region6: #{basic_block_forward.2} parent=0 // pred_check
    _
  $region7: #{basic_block_forward.2} parent=0 // pred_check_branch
    %11 = sbr.rel (0) target = $region9
  $region8: #{basic_block_forward.2} parent=0 // pred_region
    _
  $region9: #{basic_block_forward.2} parent=0 // pred_fallthru
    _
  // Predicated region
  $region10: #{basic_block_forward.2} parent=0 // pred_check
    _
  $region11: #{basic_block_forward.2} parent=0 // pred_check_branch
    %13 = sbr.rel (0) target = $region13
  $region12: #{basic_block_forward.2} parent=0 // pred_region
    _
  $region13: #{basic_block_forward.2} parent=0 // pred_fallthru
    _
  %p14 = scmp.eq.s32.totalorder 0, 0
  // Predicated region
  $region14: #{basic_block_forward.2} parent=0 // pred_check
    %p15 = pneg %p14
  $region15: #{basic_block_forward.2} parent=0 // pred_check_branch
    %17 = sbr.rel (%p15) target = $region17
  $region16: #{basic_block_forward.2} parent=0 // pred_region
    %18 = vst [vmem:[#allocation2] sm:$0xff] 0.0
    %19 = vst [vmem:[#allocation2 + $0x8] sm:$0xff] 0.0
    %20 = vst [vmem:[#allocation2 + $0x10] sm:$0xff] 0.0
    %21 = vst [vmem:[#allocation2 + $0x18] sm:$0xff] 0.0
    %22 = vst [vmem:[#allocation2 + $0x20] sm:$0xff] 0.0
    %23 = vst [vmem:[#allocation2 + $0x28] sm:$0xff] 0.0
    %24 = vst [vmem:[#allocation2 + $0x30] sm:$0xff] 0.0
    %25 = vst [vmem:[#allocation2 + $0x38] sm:$0xff] 0.0
    %26 = vst [vmem:[#allocation2 + $0x40] sm:$0xff] 0.0
    %27 = vst [vmem:[#allocation2 + $0x48] sm:$0xff] 0.0
    %28 = vst [vmem:[#allocation2 + $0x50] sm:$0xff] 0.0
    %29 = vst [vmem:[#allocation2 + $0x58] sm:$0xff] 0.0
    %30 = vst [vmem:[#allocation2 + $0x60] sm:$0xff] 0.0
    %31 = vst [vmem:[#allocation2 + $0x68] sm:$0xff] 0.0
    %32 = vst [vmem:[#allocation2 + $0x70] sm:$0xff] 0.0
    %33 = vst [vmem:[#allocation2 + $0x78] sm:$0xff] 0.0
  $region17: #{basic_block_forward.2} parent=0 // pred_fallthru
    _
  %v34 = vld [vmem:[#allocation2] sm:$0xff]
  %v35 = vld [vmem:[#allocation2 + $0x8] sm:$0xff]
  %v36 = vld [vmem:[#allocation2 + $0x10] sm:$0xff]
  %v37 = vld [vmem:[#allocation2 + $0x18] sm:$0xff]
  %v38 = vld [vmem:[#allocation2 + $0x20] sm:$0xff]
  %v39 = vld [vmem:[#allocation2 + $0x28] sm:$0xff]
  %v40 = vld [vmem:[#allocation2 + $0x30] sm:$0xff]
  %v41 = vld [vmem:[#allocation2 + $0x38] sm:$0xff]
  %v42 = vld [vmem:[#allocation2 + $0x40] sm:$0xff]
  %v43 = vld [vmem:[#allocation2 + $0x48] sm:$0xff]
  %v44 = vld [vmem:[#allocation2 + $0x50] sm:$0xff]
  %v45 = vld [vmem:[#allocation2 + $0x58] sm:$0xff]
  %v46 = vld [vmem:[#allocation2 + $0x60] sm:$0xff]
  %v47 = vld [vmem:[#allocation2 + $0x68] sm:$0xff]
  %v48 = vld [vmem:[#allocation2 + $0x70] sm:$0xff]
  %v49 = vld [vmem:[#allocation2 + $0x78] sm:$0xff]
  %v50 = vld [vmem:[%s0] sm:$0xf]
  %v51 = vld [vmem:[%s0 + $0x4] sm:$0xf]
  %v52 = vld [vmem:[%s0 + $0x8] sm:$0xf]
  %v53 = vld [vmem:[%s0 + $0xc] sm:$0xf]
  %v54 = vld [vmem:[%s0 + $0x10] sm:$0xf]
  %v55 = vld [vmem:[%s0 + $0x14] sm:$0xf]
  %v56 = vld [vmem:[%s0 + $0x18] sm:$0xf]
  %v57 = vld [vmem:[%s0 + $0x1c] sm:$0xf]
  %v58 = vld [vmem:[%s0 + $0x20] sm:$0xf]
  %v59 = vld [vmem:[%s0 + $0x24] sm:$0xf]
  %v60 = vld [vmem:[%s0 + $0x28] sm:$0xf]
  %v61 = vld [vmem:[%s0 + $0x2c] sm:$0xf]
  %v62 = vld [vmem:[%s0 + $0x30] sm:$0xf]
  %v63 = vld [vmem:[%s0 + $0x34] sm:$0xf]
  %v64 = vld [vmem:[%s0 + $0x38] sm:$0xf]
  %v65 = vld [vmem:[%s0 + $0x3c] sm:$0xf]
  %v66 = vld [vmem:[%s1] sm:$0xf]
  %v67 = vld [vmem:[%s1 + $0x4] sm:$0xf]
  %v68 = vld [vmem:[%s1 + $0x8] sm:$0xf]
  %v69 = vld [vmem:[%s1 + $0xc] sm:$0xf]
  %v70 = vld [vmem:[%s1 + $0x10] sm:$0xf]
  %v71 = vld [vmem:[%s1 + $0x14] sm:$0xf]
  %v72 = vld [vmem:[%s1 + $0x18] sm:$0xf]
  %v73 = vld [vmem:[%s1 + $0x1c] sm:$0xf]
  %v74 = vld [vmem:[%s1 + $0x20] sm:$0xf]
  %v75 = vld [vmem:[%s1 + $0x24] sm:$0xf]
  %v76 = vld [vmem:[%s1 + $0x28] sm:$0xf]
  %v77 = vld [vmem:[%s1 + $0x2c] sm:$0xf]
  %v78 = vld [vmem:[%s1 + $0x30] sm:$0xf]
  %v79 = vld [vmem:[%s1 + $0x34] sm:$0xf]
  %v80 = vld [vmem:[%s1 + $0x38] sm:$0xf]
  %v81 = vld [vmem:[%s1 + $0x3c] sm:$0xf]
  %v98 = vunpack.c.l.b16 %v50
  %v99 = vunpack.c.l.b16 %v51
  %v100 = vunpack.c.l.b16 %v52
  %v101 = vunpack.c.l.b16 %v53
  %v102 = vunpack.c.l.b16 %v54
  %v103 = vunpack.c.l.b16 %v55
  %v104 = vunpack.c.l.b16 %v56
  %v105 = vunpack.c.l.b16 %v57
  %v106 = vunpack.c.l.b16 %v58
  %v107 = vunpack.c.l.b16 %v59
  %v108 = vunpack.c.l.b16 %v60
  %v109 = vunpack.c.l.b16 %v61
  %v110 = vunpack.c.l.b16 %v62
  %v111 = vunpack.c.l.b16 %v63
  %v112 = vunpack.c.l.b16 %v64
  %v113 = vunpack.c.l.b16 %v65
  %v114 = vpack.c.b16 %v99, %v98
  %v115 = vpack.c.b16 %v101, %v100
  %v116 = vpack.c.b16 %v103, %v102
  %v117 = vpack.c.b16 %v105, %v104
  %v118 = vpack.c.b16 %v107, %v106
  %v119 = vpack.c.b16 %v109, %v108
  %v120 = vpack.c.b16 %v111, %v110
  %v121 = vpack.c.b16 %v113, %v112
  %v146 = vunpack.c.l.b16 %v66
  %v147 = vunpack.c.l.b16 %v67
  %v148 = vunpack.c.l.b16 %v68
  %v149 = vunpack.c.l.b16 %v69
  %v150 = vunpack.c.l.b16 %v70
  %v151 = vunpack.c.l.b16 %v71
  %v152 = vunpack.c.l.b16 %v72
  %v153 = vunpack.c.l.b16 %v73
  %v154 = vunpack.c.l.b16 %v74
  %v155 = vunpack.c.l.b16 %v75
  %v156 = vunpack.c.l.b16 %v76
  %v157 = vunpack.c.l.b16 %v77
  %v158 = vunpack.c.l.b16 %v78
  %v159 = vunpack.c.l.b16 %v79
  %v160 = vunpack.c.l.b16 %v80
  %v161 = vunpack.c.l.b16 %v81
  %v162 = vpack.c.b16 %v147, %v146
  %v163 = vpack.c.b16 %v149, %v148
  %v164 = vpack.c.b16 %v151, %v150
  %v165 = vpack.c.b16 %v153, %v152
  %v166 = vpack.c.b16 %v155, %v154
  %v167 = vpack.c.b16 %v157, %v156
  %v168 = vpack.c.b16 %v159, %v158
  %v169 = vpack.c.b16 %v161, %v160
  %178 = vmatpush.bf16.msra.mxu0 %v169
  %179 = vmatpush.bf16.msra.mxu0 %v168
  %180 = vmatpush.bf16.msra.mxu0 %v167
  %181 = vmatpush.bf16.msra.mxu0 %v166
  %182 = vmatpush.bf16.msra.mxu0 %v165
  %183 = vmatpush.bf16.msra.mxu0 %v164
  %184 = vmatpush.bf16.msra.mxu0 %v163
  %185 = vmatpush.bf16.msra.mxu0 %v162
  %186 = vmatmul.bf16.gmra.mxu0 %v114
  %v187 = vpop.f32.mrf.mxu0
  %v188 = vadd.f32 0.0, %v187
  %v189 = vpop.f32.mrf.mxu0
  %v190 = vadd.f32 0.0, %v189
  %191 = vmatmul.bf16.gmra.mxu0 %v115
  %v192 = vpop.f32.mrf.mxu0
  %v193 = vadd.f32 0.0, %v192
  %v194 = vpop.f32.mrf.mxu0
  %v195 = vadd.f32 0.0, %v194
  %196 = vmatmul.bf16.gmra.mxu0 %v116
  %v197 = vpop.f32.mrf.mxu0
  %v198 = vadd.f32 0.0, %v197
  %v199 = vpop.f32.mrf.mxu0
  %v200 = vadd.f32 0.0, %v199
  %201 = vmatmul.bf16.gmra.mxu0 %v117
  %v202 = vpop.f32.mrf.mxu0
  %v203 = vadd.f32 0.0, %v202
  %v204 = vpop.f32.mrf.mxu0
  %v205 = vadd.f32 0.0, %v204
  %206 = vmatmul.bf16.gmra.mxu0 %v118
  %v207 = vpop.f32.mrf.mxu0
  %v208 = vadd.f32 0.0, %v207
  %v209 = vpop.f32.mrf.mxu0
  %v210 = vadd.f32 0.0, %v209
  %211 = vmatmul.bf16.gmra.mxu0 %v119
  %v212 = vpop.f32.mrf.mxu0
  %v213 = vadd.f32 0.0, %v212
  %v214 = vpop.f32.mrf.mxu0
  %v215 = vadd.f32 0.0, %v214
  %216 = vmatmul.bf16.gmra.mxu0 %v120
  %v217 = vpop.f32.mrf.mxu0
  %v218 = vadd.f32 0.0, %v217
  %v219 = vpop.f32.mrf.mxu0
  %v220 = vadd.f32 0.0, %v219
  %221 = vmatmul.bf16.gmra.mxu0 %v121
  %v222 = vpop.f32.mrf.mxu0
  %v223 = vadd.f32 0.0, %v222
  %v224 = vpop.f32.mrf.mxu0
  %v225 = vadd.f32 0.0, %v224
  %226 = vdwg.mxu0
  %v227 = vadd.f32 %v34, %v188
  %v228 = vadd.f32 %v35, %v190
  %v229 = vadd.f32 %v36, %v193
  %v230 = vadd.f32 %v37, %v195
  %v231 = vadd.f32 %v38, %v198
  %v232 = vadd.f32 %v39, %v200
  %v233 = vadd.f32 %v40, %v203
  %v234 = vadd.f32 %v41, %v205
  %v235 = vadd.f32 %v42, %v208
  %v236 = vadd.f32 %v43, %v210
  %v237 = vadd.f32 %v44, %v213
  %v238 = vadd.f32 %v45, %v215
  %v239 = vadd.f32 %v46, %v218
  %v240 = vadd.f32 %v47, %v220
  %v241 = vadd.f32 %v48, %v223
  %v242 = vadd.f32 %v49, %v225
  %243 = vst [vmem:[#allocation2] sm:$0xff] %v227
  %244 = vst [vmem:[#allocation2 + $0x8] sm:$0xff] %v228
  %245 = vst [vmem:[#allocation2 + $0x10] sm:$0xff] %v229
  %246 = vst [vmem:[#allocation2 + $0x18] sm:$0xff] %v230
  %247 = vst [vmem:[#allocation2 + $0x20] sm:$0xff] %v231
  %248 = vst [vmem:[#allocation2 + $0x28] sm:$0xff] %v232
  %249 = vst [vmem:[#allocation2 + $0x30] sm:$0xff] %v233
  %250 = vst [vmem:[#allocation2 + $0x38] sm:$0xff] %v234
  %251 = vst [vmem:[#allocation2 + $0x40] sm:$0xff] %v235
  %252 = vst [vmem:[#allocation2 + $0x48] sm:$0xff] %v236
  %253 = vst [vmem:[#allocation2 + $0x50] sm:$0xff] %v237
  %254 = vst [vmem:[#allocation2 + $0x58] sm:$0xff] %v238
  %255 = vst [vmem:[#allocation2 + $0x60] sm:$0xff] %v239
  %256 = vst [vmem:[#allocation2 + $0x68] sm:$0xff] %v240
  %257 = vst [vmem:[#allocation2 + $0x70] sm:$0xff] %v241
  %258 = vst [vmem:[#allocation2 + $0x78] sm:$0xff] %v242
  // Predicated region
  $region18: #{basic_block_forward.2} parent=0 // pred_check
    %p259 = pneg %p14
  $region19: #{basic_block_forward.2} parent=0 // pred_check_branch
    %261 = sbr.rel (%p259) target = $region21
  $region20: #{basic_block_forward.2} parent=0 // pred_region
    %v262 = vld [vmem:[#allocation2] sm:$0xff]
    %v263 = vld [vmem:[#allocation2 + $0x8] sm:$0xff]
    %v264 = vld [vmem:[#allocation2 + $0x10] sm:$0xff]
    %v265 = vld [vmem:[#allocation2 + $0x18] sm:$0xff]
    %v266 = vld [vmem:[#allocation2 + $0x20] sm:$0xff]
    %v267 = vld [vmem:[#allocation2 + $0x28] sm:$0xff]
    %v268 = vld [vmem:[#allocation2 + $0x30] sm:$0xff]
    %v269 = vld [vmem:[#allocation2 + $0x38] sm:$0xff]
    %v270 = vld [vmem:[#allocation2 + $0x40] sm:$0xff]
    %v271 = vld [vmem:[#allocation2 + $0x48] sm:$0xff]
    %v272 = vld [vmem:[#allocation2 + $0x50] sm:$0xff]
    %v273 = vld [vmem:[#allocation2 + $0x58] sm:$0xff]
    %v274 = vld [vmem:[#allocation2 + $0x60] sm:$0xff]
    %v275 = vld [vmem:[#allocation2 + $0x68] sm:$0xff]
    %v276 = vld [vmem:[#allocation2 + $0x70] sm:$0xff]
    %v277 = vld [vmem:[#allocation2 + $0x78] sm:$0xff]
    %v278 = vld [vmem:[%s2] sm:$0x1]
    %v280 = vperm.slane %v278, 0
    %v282 = vadd.f32 %v262, %v280
    %v283 = vadd.f32 %v263, %v280
    %v284 = vadd.f32 %v264, %v280
    %v285 = vadd.f32 %v265, %v280
    %v286 = vadd.f32 %v266, %v280
    %v287 = vadd.f32 %v267, %v280
    %v288 = vadd.f32 %v268, %v280
    %v289 = vadd.f32 %v269, %v280
    %v290 = vadd.f32 %v270, %v280
    %v291 = vadd.f32 %v271, %v280
    %v292 = vadd.f32 %v272, %v280
    %v293 = vadd.f32 %v273, %v280
    %v294 = vadd.f32 %v274, %v280
    %v295 = vadd.f32 %v275, %v280
    %v296 = vadd.f32 %v276, %v280
    %v297 = vadd.f32 %v277, %v280
    %v298 = vmax.f32 %v282, 0.0
    %v299 = vmax.f32 %v283, 0.0
    %v300 = vmax.f32 %v284, 0.0
    %v301 = vmax.f32 %v285, 0.0
    %v302 = vmax.f32 %v286, 0.0
    %v303 = vmax.f32 %v287, 0.0
    %v304 = vmax.f32 %v288, 0.0
    %v305 = vmax.f32 %v289, 0.0
    %v306 = vmax.f32 %v290, 0.0
    %v307 = vmax.f32 %v291, 0.0
    %v308 = vmax.f32 %v292, 0.0
    %v309 = vmax.f32 %v293, 0.0
    %v310 = vmax.f32 %v294, 0.0
    %v311 = vmax.f32 %v295, 0.0
    %v312 = vmax.f32 %v296, 0.0
    %v313 = vmax.f32 %v297, 0.0
    %v314 = vpack.c.bf16 %v298, %v298
    %v315 = vpack.c.bf16 %v299, %v299
    %v316 = vpack.c.bf16 %v300, %v300
    %v317 = vpack.c.bf16 %v301, %v301
    %v318 = vpack.c.bf16 %v302, %v302
    %v319 = vpack.c.bf16 %v303, %v303
    %v320 = vpack.c.bf16 %v304, %v304
    %v321 = vpack.c.bf16 %v305, %v305
    %v322 = vpack.c.bf16 %v306, %v306
    %v323 = vpack.c.bf16 %v307, %v307
    %v324 = vpack.c.bf16 %v308, %v308
    %v325 = vpack.c.bf16 %v309, %v309
    %v326 = vpack.c.bf16 %v310, %v310
    %v327 = vpack.c.bf16 %v311, %v311
    %v328 = vpack.c.bf16 %v312, %v312
    %v329 = vpack.c.bf16 %v313, %v313
    %330 = vst [vmem:[%s3] sm:$0xf] %v314
    %331 = vst [vmem:[%s3 + $0x4] sm:$0xf] %v315
    %332 = vst [vmem:[%s3 + $0x8] sm:$0xf] %v316
    %333 = vst [vmem:[%s3 + $0xc] sm:$0xf] %v317
    %334 = vst [vmem:[%s3 + $0x10] sm:$0xf] %v318
    %335 = vst [vmem:[%s3 + $0x14] sm:$0xf] %v319
    %336 = vst [vmem:[%s3 + $0x18] sm:$0xf] %v320
    %337 = vst [vmem:[%s3 + $0x1c] sm:$0xf] %v321
    %338 = vst [vmem:[%s3 + $0x20] sm:$0xf] %v322
    %339 = vst [vmem:[%s3 + $0x24] sm:$0xf] %v323
    %340 = vst [vmem:[%s3 + $0x28] sm:$0xf] %v324
    %341 = vst [vmem:[%s3 + $0x2c] sm:$0xf] %v325
    %342 = vst [vmem:[%s3 + $0x30] sm:$0xf] %v326
    %343 = vst [vmem:[%s3 + $0x34] sm:$0xf] %v327
    %344 = vst [vmem:[%s3 + $0x38] sm:$0xf] %v328
    %345 = vst [vmem:[%s3 + $0x3c] sm:$0xf] %v329
  $region21: #{basic_block_forward.2} parent=0 // pred_fallthru
    _
  // Predicated region
  $region22: #{basic_block_forward.2} parent=0 // pred_check
    _
  $region23: #{basic_block_forward.2} parent=0 // pred_check_branch
    %347 = sbr.rel (0) target = $region25
  $region24: #{basic_block_forward.2} parent=0 // pred_region
    _
  $region25: #{basic_block_forward.2} parent=0 // pred_fallthru
    _
  // Predicated region
  $region26: #{basic_block_forward.2} parent=0 // pred_check
    _
  $region27: #{basic_block_forward.2} parent=0 // pred_check_branch
    %349 = sbr.rel (0) target = $region29
  $region28: #{basic_block_forward.2} parent=0 // pred_region
    _
  $region29: #{basic_block_forward.2} parent=0 // pred_fallthru
    _

</llo_original>
